<compile_context>
chip_gen: v5e
topology: v5e:2x2
jax: 0.10.0
libtpu: 0.0.40
codegen_flags: <defaults>
</compile_context>

<pallas_src>
import math

import jax
import jax.numpy as jnp
from jax.experimental import pallas as pl
from jax.experimental.pallas import tpu as pltpu

_LANE = 128


def _scale_kernel(off_ref, scl_ref, x_ref, o_ref):
    # off/scl: (tm, 1) float32; x/o: (tm, tn) in the activation dtype.
    # out = offset + scale * x   (per-row scalars broadcast across lanes, VPU)
    o_ref[...] = (off_ref[...] + scl_ref[...] * x_ref[...]).astype(o_ref.dtype)


def _round_up(n, m):
    return ((n + m - 1) // m) * m


def scale_forward_pallas(x, weight, bias, *, target_block_bytes=2 * 1024 * 1024):
    """Pallas TPU implementation of Scale.forward for arbitrary param `shape`."""
    orig_shape = x.shape
    ndim = x.ndim
    # expand_as: view params as `shape` + trailing singleton dims.
    pshape = tuple(weight.shape) + (1,) * (ndim - weight.ndim)
    assert len(pshape) == ndim, "param rank must not exceed input rank"

    # Split input dims: rows = everything up to (and including) the rightmost
    # axis on which the params actually vary; cols = purely-broadcast trailing
    # dims.  This generalizes the (1, C, 1, 1) per-channel case.
    non_bcast = [i for i, p in enumerate(pshape) if p != 1]
    d = (non_bcast[-1] + 1) if non_bcast else 0
    lead = orig_shape[:d]
    rows = int(math.prod(lead))
    cols = int(math.prod(orig_shape[d:]))

    # Per-row f32 offset (= w) and scale (= b - w) columns; tiny vs. x traffic.
    w_lead = jnp.reshape(weight, pshape[:d]).astype(jnp.float32)
    b_lead = jnp.reshape(bias, pshape[:d]).astype(jnp.float32)
    offset = jnp.broadcast_to(w_lead, lead).reshape(rows, 1)
    scale = jnp.broadcast_to(b_lead - w_lead, lead).reshape(rows, 1)

    # Lane-dense 2-D slab of the activations.
    x2d = x.reshape(rows, cols)
    itemsize = jnp.dtype(x.dtype).itemsize

    # Keep the lane (last) dim a multiple of 128 where possible.  Small
    # unaligned trailing extents use the full extent (block dim == array dim
    # is allowed; only edge stores get masked, no padding copy).  Large
    # unaligned extents are padded so lane tiles stay bounded and 128-aligned.
    pad_cols = 0
    if cols % _LANE != 0 and cols > 32 * _LANE:
        pad_cols = _round_up(cols, _LANE) - cols
        x2d = jnp.pad(x2d, ((0, 0), (0, pad_cols)))
    cols_p = cols + pad_cols

    if cols_p % _LANE == 0:
        tn = min(cols_p, 16 * _LANE)   # up to 2048-lane tiles
    else:
        tn = cols_p                    # full extent (== array dim): allowed

    # Row tile: ~target_block_bytes per x tile, a multiple of the per-dtype
    # sublane packing (8 f32 / 16 bf16 / 32 int8); full extent if rows is small.
    sub_mult = max(8, 32 // itemsize)
    tm_cap = max(sub_mult,
                 (target_block_bytes // (tn * itemsize)) // sub_mult * sub_mult)
    tm = rows if rows <= tm_cap else tm_cap

    grid = (pl.cdiv(rows, tm), pl.cdiv(cols_p, tn))

    out2d = pl.pallas_call(
        _scale_kernel,
        out_shape=jax.ShapeDtypeStruct((rows, cols_p), x.dtype),
        grid_spec=pltpu.PrefetchScalarGridSpec(
            num_scalar_prefetch=0,
            grid=grid,
            in_specs=[
                # Param blocks depend only on the row index; with the lane axis
                # innermost they are not re-DMA'd while j advances.
                pl.BlockSpec((tm, 1), lambda i, j: (i, 0)),
                pl.BlockSpec((tm, 1), lambda i, j: (i, 0)),
                pl.BlockSpec((tm, tn), lambda i, j: (i, j)),
            ],
            out_specs=pl.BlockSpec((tm, tn), lambda i, j: (i, j)),
        ),
        compiler_params=pltpu.CompilerParams(
            dimension_semantics=("parallel", "parallel"),
        ),
    )(offset, scale, x2d)

    if pad_cols:
        out2d = out2d[:, :cols]
    return out2d.reshape(orig_shape)


def scale_forward(x, weight, bias):
    """Dispatcher: tiny inputs are cheaper as a fused XLA elementwise op."""
    if x.size * jnp.dtype(x.dtype).itemsize < (1 << 16):
        pshape = tuple(weight.shape) + (1,) * (x.ndim - weight.ndim)
        w = weight.reshape(pshape)
        b = bias.reshape(pshape)
        return (w + (b - w) * x).astype(x.dtype)
    return scale_forward_pallas(x, weight, bias)


if __name__ == "__main__":
    # NOTE: __main__ calls scale_forward_pallas directly so the Pallas kernel
    # itself is exercised even at these small test shapes (the dispatcher
    # above would route tiny inputs to plain fused XLA in production use).
    N, C, H, W = 2, 4, 16, 16
    key = jax.random.PRNGKey(0)
    k1, k2, k3 = jax.random.split(key, 3)

    # Deterministic init exactly as in Scale.__init__ (shape = [1, C, 1, 1]).
    weight = jnp.zeros((1, C, 1, 1), dtype=jnp.float32)
    bias = jnp.ones((1, C, 1, 1), dtype=jnp.float32)

    # -- check 1: canonical small NCHW input with default (identity) init --
    x = jax.random.normal(k1, (N, C, H, W), dtype=jnp.float32)
    out = jax.block_until_ready(scale_forward_pallas(x, weight, bias))
    ref = weight + (bias - weight) * x
    assert out.shape == x.shape and out.dtype == x.dtype
    assert jnp.allclose(out, ref, atol=1e-6, rtol=1e-6)

    # -- check 2: non-trivial params, multi-block 2-D grid (row + lane tiles) --
    w2 = jax.random.normal(k2, (1, C, 1, 1), dtype=jnp.float32)
    b2 = jax.random.normal(k3, (1, C, 1, 1), dtype=jnp.float32)
    x2 = jax.random.normal(k1, (4, C, 64, 64), dtype=jnp.float32)
    out2 = jax.block_until_ready(
        scale_forward_pallas(x2, w2, b2, target_block_bytes=64 * 1024))
    ref2 = w2 + (b2 - w2) * x2
    assert jnp.allclose(out2, ref2, atol=1e-5, rtol=1e-5)

    # -- check 3: bf16 activations with f32 params (dtype-cast store path) --
    xb = jax.random.normal(k2, (N, C, H, W), dtype=jnp.bfloat16)
    outb = jax.block_until_ready(scale_forward_pallas(xb, w2, b2))
    refb = (w2 + (b2 - w2) * xb.astype(jnp.float32)).astype(jnp.bfloat16)
    assert outb.dtype == jnp.bfloat16
    assert jnp.allclose(outb.astype(jnp.float32), refb.astype(jnp.float32),
                        atol=1e-2, rtol=1e-2)

    print("KERNEL_OK")
</pallas_src>

<mosaic_0001>
module attributes {stable_mosaic.version = 11 : i64} {
  func.func @_scale_kernel(%arg0: i32, %arg1: i32, %arg2: memref<8x1xf32, #tpu.memory_space<vmem>>, %arg3: memref<8x1xf32, #tpu.memory_space<vmem>>, %arg4: memref<8x256xf32, #tpu.memory_space<vmem>>, %arg5: memref<8x256xf32, #tpu.memory_space<vmem>>) attributes {dimension_semantics = [#tpu.dimension_semantics<parallel>, #tpu.dimension_semantics<parallel>], iteration_bounds = array<i64: 1, 1>, scalar_prefetch = 0 : i64, scratch_operands = 0 : i64, tpu.core_type = #tpu.core_type<tc>, window_params = [{transform_indices = @transform_0, window_bounds = array<i64: 8, 1>}, {transform_indices = @transform_1, window_bounds = array<i64: 8, 1>}, {transform_indices = @transform_2, window_bounds = array<i64: 8, 256>}, {transform_indices = @transform_3, window_bounds = array<i64: 8, 256>}]} {
    %c0 = arith.constant 0 : index
    %c0_0 = arith.constant 0 : index
    %0 = vector.load %arg2[%c0, %c0_0] : memref<8x1xf32, #tpu.memory_space<vmem>>, vector<8x1xf32>
    %c0_1 = arith.constant 0 : index
    %c0_2 = arith.constant 0 : index
    %1 = vector.load %arg3[%c0_1, %c0_2] : memref<8x1xf32, #tpu.memory_space<vmem>>, vector<8x1xf32>
    %c0_3 = arith.constant 0 : index
    %c0_4 = arith.constant 0 : index
    %2 = vector.load %arg4[%c0_3, %c0_4] : memref<8x256xf32, #tpu.memory_space<vmem>>, vector<8x256xf32>
    %3 = vector.broadcast %1 : vector<8x1xf32> to vector<8x256xf32>
    %4 = arith.mulf %3, %2 : vector<8x256xf32>
    %5 = vector.broadcast %0 : vector<8x1xf32> to vector<8x256xf32>
    %6 = arith.addf %5, %4 : vector<8x256xf32>
    %c0_5 = arith.constant 0 : index
    %c0_6 = arith.constant 0 : index
    %7 = vector.load %arg5[%c0_5, %c0_6] : memref<8x256xf32, #tpu.memory_space<vmem>>, vector<8x256xf32>
    tpu.vector_store %arg5[%c0_5, %c0_6], %6 {strides = array<i32>} : memref<8x256xf32, #tpu.memory_space<vmem>>, vector<8x256xf32>,
    return
  }
  func.func @transform_0(%arg0: i32, %arg1: i32) -> (i32, i32) {
    %c0_i32 = arith.constant 0 : i32
    %c0_i32_0 = arith.constant 0 : i32
    return %arg0, %c0_i32 : i32, i32
  }
  func.func @transform_1(%arg0: i32, %arg1: i32) -> (i32, i32) {
    %c0_i32 = arith.constant 0 : i32
    %c0_i32_0 = arith.constant 0 : i32
    return %arg0, %c0_i32 : i32, i32
  }
  func.func @transform_2(%arg0: i32, %arg1: i32) -> (i32, i32) {
    %c0_i32 = arith.constant 0 : i32
    return %arg0, %arg1 : i32, i32
  }
  func.func @transform_3(%arg0: i32, %arg1: i32) -> (i32, i32) {
    %c0_i32 = arith.constant 0 : i32
    return %arg0, %arg1 : i32, i32
  }
}

</mosaic_0001>

<llo_original>
// kernel: tpu_custom_call.1
$region0: #{tpu_custom_call.1}
  #allocation0 [shape = 'u32[]', space=smem, size = 0x4, offset = 0x4, fixed_abs, tag = 'smem constant byte address 0x4 - core index']
  #allocation1 [shape = 'u32[72,128]{1,0:T(1,128)}', space=vmem, size = 0x9000, scoped, tag = 'internal scratch']
  %s0 = inlined_call_operand.vmem [shape: f32[8,1], index: 0, kind: input, shape index: {}]
  %s1 = inlined_call_operand.vmem [shape: f32[8,1], index: 1, kind: input, shape index: {}]
  %s2 = inlined_call_operand.vmem [shape: f32[8,256], index: 2, kind: input, shape index: {}]
  %s3 = inlined_call_operand.hbm [shape: f32[8,256], index: 3, kind: output, shape index: {}]
  %s4 = sld [smem:[#allocation0]]
  $region22: #{tpu_custom_call.1} parent=0
    _
  %s6 = ssub.s32 1, %s4
  %s7 = scalar_select 0, %s6, %s4
  $region1: #{tpu_custom_call.1} parent=0
    #allocation2 [shape = 'u8[8192]{0}', space=vmem, size = 0x2000, scoped, tag = 'output window, operand 0, single buffered']
    #allocation3 [shape = 's32[1]{0}', space=sflag, size = 0x4, scoped, tag = 'scoped memory for tpu_custom_call.1']
    %8 = vsyncpa [#allocation3], 0
    // Predicated region
    $region2: #{tpu_custom_call.1} parent=1 // pred_check
      _
    $region3: #{tpu_custom_call.1} parent=1 // pred_check_branch
      %10 = sbr.rel (0) target = $region5
    $region4: #{tpu_custom_call.1} parent=1 // pred_region
      _
    $region5: #{tpu_custom_call.1} parent=1 // pred_fallthru
      _
    // Predicated region
    $region6: #{tpu_custom_call.1} parent=1 // pred_check
      _
    $region7: #{tpu_custom_call.1} parent=1 // pred_check_branch
      %12 = sbr.rel (0) target = $region9
    $region8: #{tpu_custom_call.1} parent=1 // pred_region
      _
    $region9: #{tpu_custom_call.1} parent=1 // pred_fallthru
      _
    // Predicated region
    $region10: #{tpu_custom_call.1} parent=1 // pred_check
      _
    $region11: #{tpu_custom_call.1} parent=1 // pred_check_branch
      %14 = sbr.rel (0) target = $region13
    $region12: #{tpu_custom_call.1} parent=1 // pred_region
      _
    $region13: #{tpu_custom_call.1} parent=1 // pred_fallthru
      _
    %v15 = vld [vmem:[%s0] sm:$0xff]
    %v16 = vld [vmem:[%s1] sm:$0xff]
    %v17 = vld [vmem:[%s2] sm:$0xff]
    %v18 = vld [vmem:[%s2 + $0x8] sm:$0xff]
    %20 = vset.pattern.permute.xlu0 0
    %21 = vperm.xlu0 %20, %v16
    %v22 = vpop.permute.xlu0 %21
    %v24 = vmul.f32 %v22, %v17
    %v25 = vmul.f32 %v22, %v18
    %27 = vset.pattern.permute.xlu0 0
    %28 = vperm.xlu0 %27, %v15
    %v29 = vpop.permute.xlu0 %28
    %v31 = vadd.f32 %v29, %v24
    %v32 = vadd.f32 %v29, %v25
    %33 = vst [vmem:[#allocation2] sm:$0xff] %v31
    %34 = vst [vmem:[#allocation2 + $0x8] sm:$0xff] %v32
    // Predicated region
    $region14: #{tpu_custom_call.1} parent=1 // pred_check
      _
    $region15: #{tpu_custom_call.1} parent=1 // pred_check_branch
      %36 = sbr.rel (0) target = $region17
    $region16: #{tpu_custom_call.1} parent=1 // pred_region
      %38 = vsyncadd [#allocation3], 0
      %s40 = sshll.u32 [#allocation2], 4
      %s41 = int_to_ptr.vmem [resolvable:$true] %s40
      %s42 = sshll.u32 %s3, 4
      %s43 = int_to_ptr.hbm [resolvable:$true] %s42
      %45 = dma.vmem_to_hbm [thread:$0]  %s41, 256, %s43, [#allocation3]
    $region17: #{tpu_custom_call.1} parent=1 // pred_fallthru
      _
    // Predicated region
    $region18: #{tpu_custom_call.1} parent=1 // pred_check
      _
    $region19: #{tpu_custom_call.1} parent=1 // pred_check_branch
      %47 = sbr.rel (0) target = $region21
    $region20: #{tpu_custom_call.1} parent=1 // pred_region
      %49 = dma.done [#allocation3], 256
    $region21: #{tpu_custom_call.1} parent=1 // pred_fallthru
      _
    %50 = vsyncpa [#allocation3], 1

</llo_original>
